<compile_context>
chip_gen: v5e
topology: v5e:2x2
jax: 0.10.0
libtpu: 0.0.40
codegen_flags: <defaults>
</compile_context>

<pallas_src>
import functools

import jax
import jax.numpy as jnp
import numpy as np
from jax.experimental import pallas as pl
from jax.experimental.pallas import tpu as pltpu

LN_EPS = 1e-5


def _round_up(x, m):
    return (x + m - 1) // m * m


def _pick_tm(M):
    """Row-tile size. Prefer no-pad divisors of M (skips a full extra HBM pass
    over the im2col matrix) with grid >= 2 so the single "parallel" axis can
    load-balance two v7x TensorCores; otherwise fall back to a big tile."""
    for tm in (1024, 896, 768, 640, 512, 448, 384, 320, 256, 224, 192, 160, 128):
        if M % tm == 0 and M // tm >= 2:
            return tm
    if M <= 1024:
        if M >= 512:                       # split in two so both TCs get work
            return _round_up((M + 1) // 2, 32)
        return _round_up(M, 32)            # tiny problem: single tile
    return 1024                            # large M, no nice divisor: pad


def _erf(x):
    # Abramowitz & Stegun 7.1.26 polynomial; with the approx EUP reciprocal the
    # effective accuracy is ~1e-3..1e-4 absolute (lax.erf has no Mosaic lowering).
    a1, a2, a3, a4, a5 = 0.254829592, -0.284496736, 1.421413741, -1.453152027, 1.061405429
    p = 0.3275911
    ax = jnp.abs(x)
    t = pl.reciprocal(1.0 + p * ax, approx=True)      # EUP, frees the VALU
    poly = ((((a5 * t + a4) * t + a3) * t + a2) * t + a1) * t
    y = 1.0 - poly * jnp.exp(-ax * ax)                 # exp on the EUP
    return jnp.where(x >= 0.0, y, -y)


def _gelu_erf(x):
    # torch.nn.GELU() default (erf-based).
    return 0.5 * x * (1.0 + _erf(x * float(1.0 / np.sqrt(2.0))))


def _gelu_tanh(x):
    # tanh approximation: tanh lands on the EUP, ~half the VALU ops of the erf
    # polynomial.  ~1e-3 max deviation from exact-erf GELU (documented).
    c = float(np.sqrt(2.0 / np.pi))
    return 0.5 * x * (1.0 + jnp.tanh(c * (x + 0.044715 * x * x * x)))


def patch_embed_kernel(xp_ref, w_ref, b_ref, g_ref, beta_ref, o_ref, *, use_tanh_gelu):
    # xp_ref: (tm, Kp) patches; w_ref: (Kp, E); b/g/beta: (1, E) f32;
    # o_ref: (tm, E) in out_dtype.  Non-overlapping-patch conv == one MXU
    # matmul; accumulate in f32.
    y = jnp.dot(xp_ref[...], w_ref[...], preferred_element_type=jnp.float32)
    y = y + b_ref[0]

    # LayerNorm over embed_dim (lane axis), one-pass stats (E[y], E[y^2]) so we
    # skip the extra (y - mu)^2 elementwise pass; biased variance matches
    # PyTorch; everything in f32.
    mu = jnp.mean(y, axis=-1, keepdims=True)
    ms = jnp.mean(y * y, axis=-1, keepdims=True)
    var = jnp.maximum(ms - mu * mu, 0.0)
    y = (y - mu) * jax.lax.rsqrt(var + LN_EPS) * g_ref[0] + beta_ref[0]

    y = _gelu_tanh(y) if use_tanh_gelu else _gelu_erf(y)
    o_ref[...] = y.astype(o_ref.dtype)


@functools.partial(
    jax.jit,
    static_argnames=("patch_size", "compute_dtype", "out_dtype", "output_format",
                     "use_tanh_gelu"))
def patch_embed_forward(x_nchw, params, patch_size,
                        compute_dtype=jnp.bfloat16,
                        out_dtype=jnp.bfloat16,
                        output_format="NCHW",
                        use_tanh_gelu=False):
    """x_nchw: (N, Cin, H, W). Returns:
         "NCHW" -> (N, E, Hp, Wp)   (module-faithful default)
         "NHWC" -> (N, Hp, Wp, E)   (skips the lane-unfriendly transpose)
         "NLC"  -> (N, Hp*Wp, E)    (ViT token layout, also skips it)
    """
    assert output_format in ("NCHW", "NHWC", "NLC")
    N, Cin, H, W = x_nchw.shape
    p = patch_size
    assert H % p == 0 and W % p == 0, "image size must be divisible by patch size"
    Hp, Wp = H // p, W // p
    K = Cin * p * p
    E = params["w"].shape[1]
    assert params["w"].shape == (K, E)
    assert E % 128 == 0, "embed_dim should be a multiple of 128 for lane density"

    # im2col for a stride==kernel conv: pure reshape/transpose.  Cast to the
    # compute dtype FIRST so the materialized (M, K) matrix is written/read in
    # bf16 (half the un-hidable wrapper HBM traffic).  K-order is (Cin, ph, pw),
    # matching a flattened torch Conv2d weight.
    xp = x_nchw.astype(compute_dtype).reshape(N, Cin, Hp, p, Wp, p)
    xp = xp.transpose(0, 2, 4, 1, 3, 5).reshape(N * Hp * Wp, K)
    M = N * Hp * Wp

    tm = _pick_tm(M)
    M_pad = _round_up(M, tm)
    K_pad = _round_up(K, 128)          # keep the MXU / lane-vregs unmasked
    if M_pad != M or K_pad != K:
        xp = jnp.pad(xp, ((0, M_pad - M), (0, K_pad - K)))

    w = params["w"].astype(compute_dtype)
    if K_pad != K:
        w = jnp.pad(w, ((0, K_pad - K), (0, 0)))   # zero rows: product unchanged
    row = lambda v: v.reshape(1, -1).astype(jnp.float32)

    in_item = jnp.dtype(compute_dtype).itemsize
    out_item = jnp.dtype(out_dtype).itemsize
    vmem_est = (2 * tm * K_pad * in_item            # double-buffered patch tiles
                + 2 * tm * E * out_item             # double-buffered output tiles
                + 2 * (K_pad * E * in_item + 3 * E * 4))   # weight + LN params
    # 48 MiB ceiling: 64 MiB is the whole physical VMEM of a v7x TensorCore.
    vmem_limit = int(min(max(2 * vmem_est, 16 << 20), 48 << 20))

    grid_spec = pltpu.PrefetchScalarGridSpec(
        num_scalar_prefetch=0,
        grid=(M_pad // tm,),
        in_specs=[
            pl.BlockSpec((tm, K_pad), lambda i: (i, 0)),   # patch rows (tiled over M)
            pl.BlockSpec((K_pad, E), lambda i: (0, 0)),    # proj weight (VMEM-resident)
            pl.BlockSpec((1, E), lambda i: (0, 0)),        # proj bias
            pl.BlockSpec((1, E), lambda i: (0, 0)),        # LN gamma
            pl.BlockSpec((1, E), lambda i: (0, 0)),        # LN beta
        ],
        out_specs=pl.BlockSpec((tm, E), lambda i: (i, 0)),
    )

    cost = pl.CostEstimate(
        flops=2 * M_pad * K_pad * E,
        transcendentals=2 * M_pad * E,
        bytes_accessed=M_pad * K_pad * in_item + K_pad * E * in_item
                       + M_pad * E * out_item + 3 * E * 4)

    out = pl.pallas_call(
        functools.partial(patch_embed_kernel, use_tanh_gelu=use_tanh_gelu),
        out_shape=jax.ShapeDtypeStruct((M_pad, E), out_dtype),
        grid_spec=grid_spec,
        compiler_params=pltpu.CompilerParams(
            dimension_semantics=("parallel",),
            vmem_limit_bytes=vmem_limit),
        cost_estimate=cost,
    )(xp, w, row(params["b"]), row(params["g"]), row(params["beta"]))

    out = out[:M]
    if output_format == "NLC":
        return out.reshape(N, Hp * Wp, E)
    out = out.reshape(N, Hp, Wp, E)
    if output_format == "NHWC":
        return out
    # Module-faithful NCHW.  GELU is elementwise so applying it before this
    # layout transpose is equivalent to the PyTorch op order.
    return jnp.transpose(out, (0, 3, 1, 2))


def reference_forward(x_nchw, params, patch_size):
    """Pure-JAX/XLA reference (HIGHEST-precision conv + exact erf), NCHW out."""
    N, Cin, H, W = x_nchw.shape
    p = patch_size
    E = params["w"].shape[1]
    # (K, E) with K-order (Cin, ph, pw)  ->  HWIO (p, p, Cin, E)
    w_conv = params["w"].reshape(Cin, p, p, E).transpose(1, 2, 0, 3)
    y = jax.lax.conv_general_dilated(
        x_nchw.astype(jnp.float32), w_conv.astype(jnp.float32),
        window_strides=(p, p), padding="VALID",
        dimension_numbers=("NCHW", "HWIO", "NHWC"),
        precision=jax.lax.Precision.HIGHEST) + params["b"]
    mu = y.mean(-1, keepdims=True)
    var = ((y - mu) ** 2).mean(-1, keepdims=True)
    y = (y - mu) / jnp.sqrt(var + LN_EPS) * params["g"] + params["beta"]
    y = 0.5 * y * (1.0 + jax.scipy.special.erf(y * float(1.0 / np.sqrt(2.0))))
    return jnp.transpose(y, (0, 3, 1, 2))            # (N, E, Hp, Wp)


def init_params(key, in_channels, patch_size, embed_dim):
    K = in_channels * patch_size * patch_size
    kw, kb, kg, kbe = jax.random.split(key, 4)
    n = lambda k, s, scale: (scale * jax.random.normal(k, s)).astype(jnp.float32)
    return {
        "w": n(kw, (K, embed_dim), 0.02),
        "b": n(kb, (embed_dim,), 0.02),
        "g": 1.0 + n(kg, (embed_dim,), 0.02),
        "beta": n(kbe, (embed_dim,), 0.02),
    }


if __name__ == "__main__":
    # Small config consistent with the module: img 32, patch 8 -> 4x4 patches,
    # embed_dim 128 (lane-dense; the production default 768 is also a multiple
    # of 128).  K = 3*8*8 = 192 gets zero-padded to 256 in the wrapper.
    N, Cin, IMG, P, E = 2, 3, 32, 8, 128
    key = jax.random.PRNGKey(0)
    kx, kp = jax.random.split(key)
    x = jax.random.normal(kx, (N, Cin, IMG, IMG), dtype=jnp.float32)
    params = init_params(kp, Cin, P, E)
    Hp = Wp = IMG // P

    ref = jax.block_until_ready(reference_forward(x, params, P))
    ref_nlc = jnp.transpose(ref, (0, 2, 3, 1)).reshape(N, Hp * Wp, E)

    # 1) Module-faithful high-precision path: f32 MXU operands, f32 store,
    #    NCHW output, exact-erf GELU -> tight parity check.
    out_f32 = jax.block_until_ready(patch_embed_forward(
        x, params, P, compute_dtype=jnp.float32, out_dtype=jnp.float32,
        output_format="NCHW", use_tanh_gelu=False))
    # 2) Default fast path: bf16 operands + bf16 store, still NCHW / exact erf.
    out_bf16 = jax.block_until_ready(patch_embed_forward(
        x, params, P, compute_dtype=jnp.bfloat16, out_dtype=jnp.bfloat16,
        output_format="NCHW", use_tanh_gelu=False))
    # 3) Fastest path (perf review): bf16 everywhere, tanh-GELU, token (N, L, E)
    #    output -> no NCHW transpose at all.
    out_tok = jax.block_until_ready(patch_embed_forward(
        x, params, P, compute_dtype=jnp.bfloat16, out_dtype=jnp.bfloat16,
        output_format="NLC", use_tanh_gelu=True))

    assert out_f32.shape == (N, E, Hp, Wp), out_f32.shape
    assert out_bf16.shape == (N, E, Hp, Wp), out_bf16.shape
    assert out_tok.shape == (N, Hp * Wp, E), out_tok.shape

    err_f32 = float(jnp.max(jnp.abs(out_f32 - ref)))
    err_bf16 = float(jnp.max(jnp.abs(out_bf16.astype(jnp.float32) - ref)))
    err_tok = float(jnp.max(jnp.abs(out_tok.astype(jnp.float32) - ref_nlc)))

    # f32 path: differences come only from the ~1e-3-accurate A&S erf /
    # approx-reciprocal GELU and MXU f32 rounding.
    assert err_f32 < 2e-2, f"f32 path max abs error {err_f32}"
    # bf16 paths: bf16 MXU operands + bf16 output store (and, for the token
    # path, the tanh-GELU ~1e-3 deviation) -> documented precision trade.
    assert err_bf16 < 8e-2, f"bf16 path max abs error {err_bf16}"
    assert err_tok < 8e-2, f"bf16 tanh/token path max abs error {err_tok}"
    print("KERNEL_OK")
</pallas_src>

<mosaic_0001>
module attributes {stable_mosaic.version = 11 : i64} {
  func.func @patch_embed_kernel(%arg0: i32, %arg1: memref<32x256xf32, #tpu.memory_space<vmem>>, %arg2: memref<256x128xf32, #tpu.memory_space<vmem>>, %arg3: memref<1x128xf32, #tpu.memory_space<vmem>>, %arg4: memref<1x128xf32, #tpu.memory_space<vmem>>, %arg5: memref<1x128xf32, #tpu.memory_space<vmem>>, %arg6: memref<32x128xf32, #tpu.memory_space<vmem>>) attributes {dimension_semantics = [#tpu.dimension_semantics<parallel>], iteration_bounds = array<i64: 1>, scalar_prefetch = 0 : i64, scratch_operands = 0 : i64, tpu.core_type = #tpu.core_type<tc>, window_params = [{transform_indices = @transform_0, window_bounds = array<i64: 32, 256>}, {pipeline_mode = #tpu.pipeline_mode<synchronous>, transform_indices = @transform_1, window_bounds = array<i64: 256, 128>}, {pipeline_mode = #tpu.pipeline_mode<synchronous>, transform_indices = @transform_2, window_bounds = array<i64: 1, 128>}, {pipeline_mode = #tpu.pipeline_mode<synchronous>, transform_indices = @transform_3, window_bounds = array<i64: 1, 128>}, {pipeline_mode = #tpu.pipeline_mode<synchronous>, transform_indices = @transform_4, window_bounds = array<i64: 1, 128>}, {transform_indices = @transform_5, window_bounds = array<i64: 32, 128>}]} {
    %c0 = arith.constant 0 : index
    %c0_0 = arith.constant 0 : index
    %0 = vector.load %arg1[%c0, %c0_0] : memref<32x256xf32, #tpu.memory_space<vmem>>, vector<32x256xf32>
    %c0_1 = arith.constant 0 : index
    %c0_2 = arith.constant 0 : index
    %1 = vector.load %arg2[%c0_1, %c0_2] : memref<256x128xf32, #tpu.memory_space<vmem>>, vector<256x128xf32>
    %cst = arith.constant dense<0.000000e+00> : vector<32x128xf32>
    %2 = tpu.matmul %0, %1, %cst {dimension_numbers = #tpu.dot_dimension_numbers<[1], [0], [0], [1], [0, 0, 1, 1], [], []>} : vector<32x256xf32>, vector<256x128xf32>, vector<32x128xf32> -> vector<32x128xf32>
    %c0_3 = arith.constant 0 : index
    %c0_4 = arith.constant 0 : index
    %3 = vector.load %arg3[%c0_3, %c0_4] : memref<1x128xf32, #tpu.memory_space<vmem>>, vector<1x128xf32>
    %4 = vector.shape_cast %3 : vector<1x128xf32> to vector<128xf32>
    %5 = vector.shape_cast %4 : vector<128xf32> to vector<1x128xf32>
    %6 = vector.broadcast %5 : vector<1x128xf32> to vector<32x128xf32>
    %7 = arith.addf %2, %6 : vector<32x128xf32>
    %cst_5 = arith.constant dense<0.000000e+00> : vector<32xf32>
    %8 = vector.multi_reduction <add>, %7, %cst_5 [1] : vector<32x128xf32> to vector<32xf32>
    %9 = vector.shape_cast %8 : vector<32xf32> to vector<32x1xf32>
    %cst_6 = arith.constant 1.280000e+02 : f32
    %10 = vector.broadcast %cst_6 : f32 to vector<32x1xf32>
    %11 = arith.divf %9, %10 : vector<32x1xf32>
    %12 = arith.mulf %7, %7 : vector<32x128xf32>
    %cst_7 = arith.constant dense<0.000000e+00> : vector<32xf32>
    %13 = vector.multi_reduction <add>, %12, %cst_7 [1] : vector<32x128xf32> to vector<32xf32>
    %14 = vector.shape_cast %13 : vector<32xf32> to vector<32x1xf32>
    %cst_8 = arith.constant 1.280000e+02 : f32
    %15 = vector.broadcast %cst_8 : f32 to vector<32x1xf32>
    %16 = arith.divf %14, %15 : vector<32x1xf32>
    %17 = arith.mulf %11, %11 : vector<32x1xf32>
    %18 = arith.subf %16, %17 : vector<32x1xf32>
    %cst_9 = arith.constant 0.000000e+00 : f32
    %19 = vector.broadcast %cst_9 : f32 to vector<32x1xf32>
    %20 = arith.maximumf %18, %19 : vector<32x1xf32>
    %21 = vector.broadcast %11 : vector<32x1xf32> to vector<32x128xf32>
    %22 = arith.subf %7, %21 : vector<32x128xf32>
    %cst_10 = arith.constant 9.99999974E-6 : f32
    %23 = vector.broadcast %cst_10 : f32 to vector<32x1xf32>
    %24 = arith.addf %20, %23 : vector<32x1xf32>
    %25 = math.rsqrt %24 : vector<32x1xf32>
    %26 = vector.broadcast %25 : vector<32x1xf32> to vector<32x128xf32>
    %27 = arith.mulf %22, %26 : vector<32x128xf32>
    %c0_11 = arith.constant 0 : index
    %c0_12 = arith.constant 0 : index
    %28 = vector.load %arg4[%c0_11, %c0_12] : memref<1x128xf32, #tpu.memory_space<vmem>>, vector<1x128xf32>
    %29 = vector.shape_cast %28 : vector<1x128xf32> to vector<128xf32>
    %30 = vector.shape_cast %29 : vector<128xf32> to vector<1x128xf32>
    %31 = vector.broadcast %30 : vector<1x128xf32> to vector<32x128xf32>
    %32 = arith.mulf %27, %31 : vector<32x128xf32>
    %c0_13 = arith.constant 0 : index
    %c0_14 = arith.constant 0 : index
    %33 = vector.load %arg5[%c0_13, %c0_14] : memref<1x128xf32, #tpu.memory_space<vmem>>, vector<1x128xf32>
    %34 = vector.shape_cast %33 : vector<1x128xf32> to vector<128xf32>
    %35 = vector.shape_cast %34 : vector<128xf32> to vector<1x128xf32>
    %36 = vector.broadcast %35 : vector<1x128xf32> to vector<32x128xf32>
    %37 = arith.addf %32, %36 : vector<32x128xf32>
    %cst_15 = arith.constant 5.000000e-01 : f32
    %38 = vector.broadcast %cst_15 : f32 to vector<32x128xf32>
    %39 = arith.mulf %38, %37 : vector<32x128xf32>
    %cst_16 = arith.constant 0.707106769 : f32
    %40 = vector.broadcast %cst_16 : f32 to vector<32x128xf32>
    %41 = arith.mulf %37, %40 : vector<32x128xf32>
    %42 = math.absf %41 : vector<32x128xf32>
    %cst_17 = arith.constant 0.327591091 : f32
    %43 = vector.broadcast %cst_17 : f32 to vector<32x128xf32>
    %44 = arith.mulf %43, %42 : vector<32x128xf32>
    %cst_18 = arith.constant 1.000000e+00 : f32
    %45 = vector.broadcast %cst_18 : f32 to vector<32x128xf32>
    %46 = arith.addf %45, %44 : vector<32x128xf32>
    %47 = tpu.reciprocal %46 {approx = true} : vector<32x128xf32> -> vector<32x128xf32>
    %cst_19 = arith.constant 1.06140542 : f32
    %48 = vector.broadcast %cst_19 : f32 to vector<32x128xf32>
    %49 = arith.mulf %48, %47 : vector<32x128xf32>
    %cst_20 = arith.constant -1.45315206 : f32
    %50 = vector.broadcast %cst_20 : f32 to vector<32x128xf32>
    %51 = arith.addf %49, %50 : vector<32x128xf32>
    %52 = arith.mulf %51, %47 : vector<32x128xf32>
    %cst_21 = arith.constant 1.42141378 : f32
    %53 = vector.broadcast %cst_21 : f32 to vector<32x128xf32>
    %54 = arith.addf %52, %53 : vector<32x128xf32>
    %55 = arith.mulf %54, %47 : vector<32x128xf32>
    %cst_22 = arith.constant -0.284496725 : f32
    %56 = vector.broadcast %cst_22 : f32 to vector<32x128xf32>
    %57 = arith.addf %55, %56 : vector<32x128xf32>
    %58 = arith.mulf %57, %47 : vector<32x128xf32>
    %cst_23 = arith.constant 0.254829586 : f32
    %59 = vector.broadcast %cst_23 : f32 to vector<32x128xf32>
    %60 = arith.addf %58, %59 : vector<32x128xf32>
    %61 = arith.mulf %60, %47 : vector<32x128xf32>
    %cst_24 = arith.constant 0.000000e+00 : f32
    %62 = vector.broadcast %cst_24 : f32 to vector<32x128xf32>
    %63 = arith.subf %62, %42 : vector<32x128xf32>
    %64 = arith.mulf %63, %42 : vector<32x128xf32>
    %65 = math.exp %64 : vector<32x128xf32>
    %66 = arith.mulf %61, %65 : vector<32x128xf32>
    %cst_25 = arith.constant 1.000000e+00 : f32
    %67 = vector.broadcast %cst_25 : f32 to vector<32x128xf32>
    %68 = arith.subf %67, %66 : vector<32x128xf32>
    %cst_26 = arith.constant 0.000000e+00 : f32
    %69 = vector.broadcast %cst_26 : f32 to vector<32x128xf32>
    %70 = arith.cmpf oge, %41, %69 : vector<32x128xf32>
    %cst_27 = arith.constant 0.000000e+00 : f32
    %71 = vector.broadcast %cst_27 : f32 to vector<32x128xf32>
    %72 = arith.subf %71, %68 : vector<32x128xf32>
    %73 = arith.select %70, %68, %72 : vector<32x128xi1>, vector<32x128xf32>
    %cst_28 = arith.constant 1.000000e+00 : f32
    %74 = vector.broadcast %cst_28 : f32 to vector<32x128xf32>
    %75 = arith.addf %74, %73 : vector<32x128xf32>
    %76 = arith.mulf %39, %75 : vector<32x128xf32>
    %c0_29 = arith.constant 0 : index
    %c0_30 = arith.constant 0 : index
    %77 = vector.load %arg6[%c0_29, %c0_30] : memref<32x128xf32, #tpu.memory_space<vmem>>, vector<32x128xf32>
    tpu.vector_store %arg6[%c0_29, %c0_30], %76 {strides = array<i32>} : memref<32x128xf32, #tpu.memory_space<vmem>>, vector<32x128xf32>,
    return
  }
  func.func @transform_0(%arg0: i32) -> (i32, i32) {
    %c0_i32 = arith.constant 0 : i32
    %c0_i32_0 = arith.constant 0 : i32
    return %arg0, %c0_i32 : i32, i32
  }
  func.func @transform_1(%arg0: i32) -> (i32, i32) {
    %c0_i32 = arith.constant 0 : i32
    %c0_i32_0 = arith.constant 0 : i32
    %c0_i32_1 = arith.constant 0 : i32
    return %c0_i32, %c0_i32_0 : i32, i32
  }
  func.func @transform_2(%arg0: i32) -> (i32, i32) {
    %c0_i32 = arith.constant 0 : i32
    %c0_i32_0 = arith.constant 0 : i32
    %c0_i32_1 = arith.constant 0 : i32
    return %c0_i32, %c0_i32_0 : i32, i32
  }
  func.func @transform_3(%arg0: i32) -> (i32, i32) {
    %c0_i32 = arith.constant 0 : i32
    %c0_i32_0 = arith.constant 0 : i32
    %c0_i32_1 = arith.constant 0 : i32
    return %c0_i32, %c0_i32_0 : i32, i32
  }
  func.func @transform_4(%arg0: i32) -> (i32, i32) {
    %c0_i32 = arith.constant 0 : i32
    %c0_i32_0 = arith.constant 0 : i32
    %c0_i32_1 = arith.constant 0 : i32
    return %c0_i32, %c0_i32_0 : i32, i32
  }
  func.func @transform_5(%arg0: i32) -> (i32, i32) {
    %c0_i32 = arith.constant 0 : i32
    %c0_i32_0 = arith.constant 0 : i32
    return %arg0, %c0_i32 : i32, i32
  }
}

</mosaic_0001>

<llo_original>
// kernel: patch_embed_forward.1
$region0: #{patch_embed_forward.1}
  #allocation0 [shape = 'u32[]', space=smem, size = 0x4, offset = 0x4, fixed_abs, tag = 'smem constant byte address 0x4 - core index']
  #allocation1 [shape = 'u32[72,128]{1,0:T(1,128)}', space=vmem, size = 0x9000, scoped, tag = 'internal scratch']
  %s0 = inlined_call_operand.vmem [shape: f32[32,256], index: 0, kind: input, shape index: {}]
  %s1 = inlined_call_operand.vmem [shape: f32[256,128], index: 1, kind: input, shape index: {}]
  %s2 = inlined_call_operand.vmem [shape: f32[1,128], index: 2, kind: input, shape index: {}]
  %s3 = inlined_call_operand.vmem [shape: f32[1,128], index: 3, kind: input, shape index: {}]
  %s4 = inlined_call_operand.vmem [shape: f32[1,128], index: 4, kind: input, shape index: {}]
  %s5 = inlined_call_operand.hbm [shape: f32[32,128], index: 5, kind: output, shape index: {}]
  %s6 = sld [smem:[#allocation0]]
  $region30: #{patch_embed_forward.1} parent=0
    _
  %s8 = ssub.s32 1, %s6
  %s9 = scalar_select 0, %s8, %s6
  $region1: #{patch_embed_forward.1} parent=0
    #allocation2 [shape = 'u8[16384]{0}', space=vmem, size = 0x4000, scoped, tag = 'output window, operand 0, single buffered']
    #allocation3 [shape = 's32[1]{0}', space=sflag, size = 0x4, scoped, tag = 'scoped memory for patch_embed_forward.1']
    %10 = vsyncpa [#allocation3], 0
    // Predicated region
    $region2: #{patch_embed_forward.1} parent=1 // pred_check
      _
    $region3: #{patch_embed_forward.1} parent=1 // pred_check_branch
      %12 = sbr.rel (0) target = $region5
    $region4: #{patch_embed_forward.1} parent=1 // pred_region
      _
    $region5: #{patch_embed_forward.1} parent=1 // pred_fallthru
      _
    // Predicated region
    $region6: #{patch_embed_forward.1} parent=1 // pred_check
      _
    $region7: #{patch_embed_forward.1} parent=1 // pred_check_branch
      %14 = sbr.rel (0) target = $region9
    $region8: #{patch_embed_forward.1} parent=1 // pred_region
      _
    $region9: #{patch_embed_forward.1} parent=1 // pred_fallthru
      _
    // Predicated region
    $region10: #{patch_embed_forward.1} parent=1 // pred_check
      _
    $region11: #{patch_embed_forward.1} parent=1 // pred_check_branch
      %16 = sbr.rel (0) target = $region13
    $region12: #{patch_embed_forward.1} parent=1 // pred_region
      _
    $region13: #{patch_embed_forward.1} parent=1 // pred_fallthru
      _
    // Predicated region
    $region14: #{patch_embed_forward.1} parent=1 // pred_check
      _
    $region15: #{patch_embed_forward.1} parent=1 // pred_check_branch
      %18 = sbr.rel (0) target = $region17
    $region16: #{patch_embed_forward.1} parent=1 // pred_region
      _
    $region17: #{patch_embed_forward.1} parent=1 // pred_fallthru
      _
    // Predicated region
    $region18: #{patch_embed_forward.1} parent=1 // pred_check
      _
    $region19: #{patch_embed_forward.1} parent=1 // pred_check_branch
      %20 = sbr.rel (0) target = $region21
    $region20: #{patch_embed_forward.1} parent=1 // pred_region
      _
    $region21: #{patch_embed_forward.1} parent=1 // pred_fallthru
      _
    %v21 = vld [vmem:[%s0] sm:$0xff]
    %v22 = vld [vmem:[%s0 + $0x8] sm:$0xff]
    %v23 = vld [vmem:[%s0 + $0x10] sm:$0xff]
    %v24 = vld [vmem:[%s0 + $0x18] sm:$0xff]
    %v25 = vld [vmem:[%s0 + $0x20] sm:$0xff]
    %v26 = vld [vmem:[%s0 + $0x28] sm:$0xff]
    %v27 = vld [vmem:[%s0 + $0x30] sm:$0xff]
    %v28 = vld [vmem:[%s0 + $0x38] sm:$0xff]
    %v29 = vld [vmem:[%s1] sm:$0xff]
    %v30 = vld [vmem:[%s1 + $0x8] sm:$0xff]
    %v31 = vld [vmem:[%s1 + $0x10] sm:$0xff]
    %v32 = vld [vmem:[%s1 + $0x18] sm:$0xff]
    %v33 = vld [vmem:[%s1 + $0x20] sm:$0xff]
    %v34 = vld [vmem:[%s1 + $0x28] sm:$0xff]
    %v35 = vld [vmem:[%s1 + $0x30] sm:$0xff]
    %v36 = vld [vmem:[%s1 + $0x38] sm:$0xff]
    %v37 = vld [vmem:[%s1 + $0x40] sm:$0xff]
    %v38 = vld [vmem:[%s1 + $0x48] sm:$0xff]
    %v39 = vld [vmem:[%s1 + $0x50] sm:$0xff]
    %v40 = vld [vmem:[%s1 + $0x58] sm:$0xff]
    %v41 = vld [vmem:[%s1 + $0x60] sm:$0xff]
    %v42 = vld [vmem:[%s1 + $0x68] sm:$0xff]
    %v43 = vld [vmem:[%s1 + $0x70] sm:$0xff]
    %v44 = vld [vmem:[%s1 + $0x78] sm:$0xff]
    %v45 = vld [vmem:[%s1 + $0x80] sm:$0xff]
    %v46 = vld [vmem:[%s1 + $0x88] sm:$0xff]
    %v47 = vld [vmem:[%s1 + $0x90] sm:$0xff]
    %v48 = vld [vmem:[%s1 + $0x98] sm:$0xff]
    %v49 = vld [vmem:[%s1 + $0xa0] sm:$0xff]
    %v50 = vld [vmem:[%s1 + $0xa8] sm:$0xff]
    %v51 = vld [vmem:[%s1 + $0xb0] sm:$0xff]
    %v52 = vld [vmem:[%s1 + $0xb8] sm:$0xff]
    %v53 = vld [vmem:[%s1 + $0xc0] sm:$0xff]
    %v54 = vld [vmem:[%s1 + $0xc8] sm:$0xff]
    %v55 = vld [vmem:[%s1 + $0xd0] sm:$0xff]
    %v56 = vld [vmem:[%s1 + $0xd8] sm:$0xff]
    %v57 = vld [vmem:[%s1 + $0xe0] sm:$0xff]
    %v58 = vld [vmem:[%s1 + $0xe8] sm:$0xff]
    %v59 = vld [vmem:[%s1 + $0xf0] sm:$0xff]
    %v60 = vld [vmem:[%s1 + $0xf8] sm:$0xff]
    %v61 = vld [vmem:[%s2] sm:$0x1]
    %v63 = vperm.slane %v61, 0
    %65 = vmatpush.msra.mxu0 %v44
    %66 = vmatpush.msra.mxu0 %v43
    %67 = vmatpush.msra.mxu0 %v42
    %68 = vmatpush.msra.mxu0 %v41
    %69 = vmatpush.msra.mxu0 %v40
    %70 = vmatpush.msra.mxu0 %v39
    %71 = vmatpush.msra.mxu0 %v38
    %72 = vmatpush.msra.mxu0 %v37
    %73 = vmatpush.msra.mxu0 %v36
    %74 = vmatpush.msra.mxu0 %v35
    %75 = vmatpush.msra.mxu0 %v34
    %76 = vmatpush.msra.mxu0 %v33
    %77 = vmatpush.msra.mxu0 %v32
    %78 = vmatpush.msra.mxu0 %v31
    %79 = vmatpush.msra.mxu0 %v30
    %80 = vmatpush.msra.mxu0 %v29
    %81 = vmatmul.f32.gmra.mxu0 %v21
    %v82 = vpop.f32.mrf.mxu0
    %v83 = vadd.f32 %v63, %v82
    %84 = vmatmul.f32.gmra.mxu0 %v23
    %v85 = vpop.f32.mrf.mxu0
    %v86 = vadd.f32 %v63, %v85
    %87 = vmatmul.f32.gmra.mxu0 %v25
    %v88 = vpop.f32.mrf.mxu0
    %v89 = vadd.f32 %v63, %v88
    %90 = vmatmul.f32.gmra.mxu0 %v27
    %v91 = vpop.f32.mrf.mxu0
    %v92 = vadd.f32 %v63, %v91
    %93 = vdwg.mxu0
    %94 = vmatpush.msra.mxu0 %v60
    %95 = vmatpush.msra.mxu0 %v59
    %96 = vmatpush.msra.mxu0 %v58
    %97 = vmatpush.msra.mxu0 %v57
    %98 = vmatpush.msra.mxu0 %v56
    %99 = vmatpush.msra.mxu0 %v55
    %100 = vmatpush.msra.mxu0 %v54
    %101 = vmatpush.msra.mxu0 %v53
    %102 = vmatpush.msra.mxu0 %v52
    %103 = vmatpush.msra.mxu0 %v51
    %104 = vmatpush.msra.mxu0 %v50
    %105 = vmatpush.msra.mxu0 %v49
    %106 = vmatpush.msra.mxu0 %v48
    %107 = vmatpush.msra.mxu0 %v47
    %108 = vmatpush.msra.mxu0 %v46
    %109 = vmatpush.msra.mxu0 %v45
    %110 = vmatmul.f32.gmra.mxu0 %v22
    %v111 = vpop.f32.mrf.mxu0
    %v112 = vadd.f32 %v83, %v111
    %113 = vmatmul.f32.gmra.mxu0 %v24
    %v114 = vpop.f32.mrf.mxu0
    %v115 = vadd.f32 %v86, %v114
    %116 = vmatmul.f32.gmra.mxu0 %v26
    %v117 = vpop.f32.mrf.mxu0
    %v118 = vadd.f32 %v89, %v117
    %119 = vmatmul.f32.gmra.mxu0 %v28
    %v120 = vpop.f32.mrf.mxu0
    %v121 = vadd.f32 %v92, %v120
    %122 = vdwg.mxu0
    %123 = vadd.xlane.f32.xlu0 %v112
    %v124 = vpop.xlane.xlu0 %123
    %125 = vadd.xlane.f32.xlu0 %v115
    %v126 = vpop.xlane.xlu0 %125
    %127 = vadd.xlane.f32.xlu0 %v118
    %v128 = vpop.xlane.xlu0 %127
    %129 = vadd.xlane.f32.xlu0 %v121
    %v130 = vpop.xlane.xlu0 %129
    %v131 = vrcp.pop 128.0
    %v132 = vmul.f32 128.0, %v131
    %v133 = vsub.f32 1.0, %v132
    %v134 = vmul.f32 %v131, %v133
    %v135 = vadd.f32 %v131, %v134
    %vm136 = vweird.f32 %v131
    %v137 = vsel %vm136, %v131, %v135
    %v138 = vmul.f32 %v124, %v137
    %v139 = vmul.f32 %v126, %v137
    %v140 = vmul.f32 %v128, %v137
    %v141 = vmul.f32 %v130, %v137
    %v142 = vmul.f32 %v112, %v112
    %v143 = vmul.f32 %v115, %v115
    %v144 = vmul.f32 %v118, %v118
    %v145 = vmul.f32 %v121, %v121
    %146 = vadd.xlane.f32.xlu0 %v142
    %v147 = vpop.xlane.xlu0 %146
    %148 = vadd.xlane.f32.xlu0 %v143
    %v149 = vpop.xlane.xlu0 %148
    %150 = vadd.xlane.f32.xlu0 %v144
    %v151 = vpop.xlane.xlu0 %150
    %152 = vadd.xlane.f32.xlu0 %v145
    %v153 = vpop.xlane.xlu0 %152
    %v154 = vmul.f32 %v147, %v137
    %v155 = vmul.f32 %v149, %v137
    %v156 = vmul.f32 %v151, %v137
    %v157 = vmul.f32 %v153, %v137
    %v158 = vmul.f32 %v138, %v138
    %v159 = vmul.f32 %v139, %v139
    %v160 = vmul.f32 %v140, %v140
    %v161 = vmul.f32 %v141, %v141
    %v162 = vsub.f32 %v154, %v158
    %v163 = vsub.f32 %v155, %v159
    %v164 = vsub.f32 %v156, %v160
    %v165 = vsub.f32 %v157, %v161
    %v166 = vmax.f32 %v162, 0.0
    %v167 = vmax.f32 %v163, 0.0
    %v168 = vmax.f32 %v164, 0.0
    %v169 = vmax.f32 %v165, 0.0
    %v170 = vsub.f32 %v112, %v138
    %v171 = vsub.f32 %v115, %v139
    %v172 = vsub.f32 %v118, %v140
    %v173 = vsub.f32 %v121, %v141
    %v174 = vadd.f32 %v166, 1e-05
    %v175 = vadd.f32 %v167, 1e-05
    %v176 = vadd.f32 %v168, 1e-05
    %v177 = vadd.f32 %v169, 1e-05
    %v178 = vrsqrt.pop %v174
    %v179 = vmul.f32 %v178, %v174
    %v180 = vmul.f32 %v179, %v178
    %v181 = vmul.f32 0.5, %v180
    %v182 = vsub.f32 1.5, %v181
    %v183 = vmul.f32 %v178, %v182
    %vm184 = vweird.f32 %v174
    %vm185 = vweird.f32 %v178
    %vm186 = vmor %vm184, %vm185
    %v187 = vsel %vm186, %v178, %v183
    %v188 = vrsqrt.pop %v175
    %v189 = vmul.f32 %v188, %v175
    %v190 = vmul.f32 %v189, %v188
    %v191 = vmul.f32 0.5, %v190
    %v192 = vsub.f32 1.5, %v191
    %v193 = vmul.f32 %v188, %v192
    %vm194 = vweird.f32 %v175
    %vm195 = vweird.f32 %v188
    %vm196 = vmor %vm194, %vm195
    %v197 = vsel %vm196, %v188, %v193
    %v198 = vrsqrt.pop %v176
    %v199 = vmul.f32 %v198, %v176
    %v200 = vmul.f32 %v199, %v198
    %v201 = vmul.f32 0.5, %v200
    %v202 = vsub.f32 1.5, %v201
    %v203 = vmul.f32 %v198, %v202
    %vm204 = vweird.f32 %v176
    %vm205 = vweird.f32 %v198
    %vm206 = vmor %vm204, %vm205
    %v207 = vsel %vm206, %v198, %v203
    %v208 = vrsqrt.pop %v177
    %v209 = vmul.f32 %v208, %v177
    %v210 = vmul.f32 %v209, %v208
    %v211 = vmul.f32 0.5, %v210
    %v212 = vsub.f32 1.5, %v211
    %v213 = vmul.f32 %v208, %v212
    %vm214 = vweird.f32 %v177
    %vm215 = vweird.f32 %v208
    %vm216 = vmor %vm214, %vm215
    %v217 = vsel %vm216, %v208, %v213
    %v218 = vmul.f32 %v170, %v187
    %v219 = vmul.f32 %v171, %v197
    %v220 = vmul.f32 %v172, %v207
    %v221 = vmul.f32 %v173, %v217
    %v222 = vld [vmem:[%s3] sm:$0x1]
    %v224 = vperm.slane %v222, 0
    %v226 = vmul.f32 %v218, %v224
    %v227 = vmul.f32 %v219, %v224
    %v228 = vmul.f32 %v220, %v224
    %v229 = vmul.f32 %v221, %v224
    %v230 = vld [vmem:[%s4] sm:$0x1]
    %v232 = vperm.slane %v230, 0
    %v234 = vadd.f32 %v226, %v232
    %v235 = vadd.f32 %v227, %v232
    %v236 = vadd.f32 %v228, %v232
    %v237 = vadd.f32 %v229, %v232
    %v238 = vmul.f32 %v234, 0.5
    %v239 = vmul.f32 %v235, 0.5
    %v240 = vmul.f32 %v236, 0.5
    %v241 = vmul.f32 %v237, 0.5
    %v242 = vmul.f32 %v234, 0.70710677
    %v243 = vmul.f32 %v235, 0.70710677
    %v244 = vmul.f32 %v236, 0.70710677
    %v245 = vmul.f32 %v237, 0.70710677
    %v246 = vand.u32 2147483647, %v242
    %v247 = vand.u32 2147483647, %v243
    %v248 = vand.u32 2147483647, %v244
    %v249 = vand.u32 2147483647, %v245
    %v250 = vmul.f32 %v246, 0.3275911
    %v251 = vmul.f32 %v247, 0.3275911
    %v252 = vmul.f32 %v248, 0.3275911
    %v253 = vmul.f32 %v249, 0.3275911
    %v254 = vadd.f32 %v250, 1.0
    %v255 = vadd.f32 %v251, 1.0
    %v256 = vadd.f32 %v252, 1.0
    %v257 = vadd.f32 %v253, 1.0
    %v258 = vrcp.pop %v254
    %v259 = vrcp.pop %v255
    %v260 = vrcp.pop %v256
    %v261 = vrcp.pop %v257
    %v262 = vmul.f32 %v258, 1.0614054
    %v263 = vmul.f32 %v259, 1.0614054
    %v264 = vmul.f32 %v260, 1.0614054
    %v265 = vmul.f32 %v261, 1.0614054
    %v266 = vadd.f32 %v262, -1.4531521
    %v267 = vadd.f32 %v263, -1.4531521
    %v268 = vadd.f32 %v264, -1.4531521
    %v269 = vadd.f32 %v265, -1.4531521
    %v270 = vmul.f32 %v266, %v258
    %v271 = vmul.f32 %v267, %v259
    %v272 = vmul.f32 %v268, %v260
    %v273 = vmul.f32 %v269, %v261
    %v274 = vadd.f32 %v270, 1.4214138
    %v275 = vadd.f32 %v271, 1.4214138
    %v276 = vadd.f32 %v272, 1.4214138
    %v277 = vadd.f32 %v273, 1.4214138
    %v278 = vmul.f32 %v274, %v258
    %v279 = vmul.f32 %v275, %v259
    %v280 = vmul.f32 %v276, %v260
    %v281 = vmul.f32 %v277, %v261
    %v282 = vadd.f32 %v278, -0.28449672
    %v283 = vadd.f32 %v279, -0.28449672
    %v284 = vadd.f32 %v280, -0.28449672
    %v285 = vadd.f32 %v281, -0.28449672
    %v286 = vmul.f32 %v282, %v258
    %v287 = vmul.f32 %v283, %v259
    %v288 = vmul.f32 %v284, %v260
    %v289 = vmul.f32 %v285, %v261
    %v290 = vadd.f32 %v286, 0.2548296
    %v291 = vadd.f32 %v287, 0.2548296
    %v292 = vadd.f32 %v288, 0.2548296
    %v293 = vadd.f32 %v289, 0.2548296
    %v294 = vmul.f32 %v290, %v258
    %v295 = vmul.f32 %v291, %v259
    %v296 = vmul.f32 %v292, %v260
    %v297 = vmul.f32 %v293, %v261
    %v298 = vsub.f32 0.0, %v246
    %v299 = vsub.f32 0.0, %v247
    %v300 = vsub.f32 0.0, %v248
    %v301 = vsub.f32 0.0, %v249
    %v302 = vmul.f32 %v298, %v246
    %v303 = vmul.f32 %v299, %v247
    %v304 = vmul.f32 %v300, %v248
    %v305 = vmul.f32 %v301, %v249
    %v306 = vmul.f32 %v302, 1.442695
    %v307 = vpow.pop %v306
    %v308 = vmul.f32 %v303, 1.442695
    %v309 = vpow.pop %v308
    %v310 = vmul.f32 %v304, 1.442695
    %v311 = vpow.pop %v310
    %v312 = vmul.f32 %v305, 1.442695
    %v313 = vpow.pop %v312
    %v314 = vmul.f32 %v294, %v307
    %v315 = vmul.f32 %v295, %v309
    %v316 = vmul.f32 %v296, %v311
    %v317 = vmul.f32 %v297, %v313
    %v318 = vsub.f32 1.0, %v314
    %v319 = vsub.f32 1.0, %v315
    %v320 = vsub.f32 1.0, %v316
    %v321 = vsub.f32 1.0, %v317
    %vm322 = vcmp.ge.f32.partialorder %v242, 0.0
    %vm323 = vcmp.ge.f32.partialorder %v243, 0.0
    %vm324 = vcmp.ge.f32.partialorder %v244, 0.0
    %vm325 = vcmp.ge.f32.partialorder %v245, 0.0
    %v326 = vsub.f32 0.0, %v318
    %v327 = vsub.f32 0.0, %v319
    %v328 = vsub.f32 0.0, %v320
    %v329 = vsub.f32 0.0, %v321
    %v330 = vsel %vm322, %v318, %v326
    %v331 = vsel %vm323, %v319, %v327
    %v332 = vsel %vm324, %v320, %v328
    %v333 = vsel %vm325, %v321, %v329
    %v334 = vadd.f32 %v330, 1.0
    %v335 = vadd.f32 %v331, 1.0
    %v336 = vadd.f32 %v332, 1.0
    %v337 = vadd.f32 %v333, 1.0
    %v338 = vmul.f32 %v238, %v334
    %v339 = vmul.f32 %v239, %v335
    %v340 = vmul.f32 %v240, %v336
    %v341 = vmul.f32 %v241, %v337
    %342 = vst [vmem:[#allocation2] sm:$0xff] %v338
    %343 = vst [vmem:[#allocation2 + $0x8] sm:$0xff] %v339
    %344 = vst [vmem:[#allocation2 + $0x10] sm:$0xff] %v340
    %345 = vst [vmem:[#allocation2 + $0x18] sm:$0xff] %v341
    // Predicated region
    $region22: #{patch_embed_forward.1} parent=1 // pred_check
      _
    $region23: #{patch_embed_forward.1} parent=1 // pred_check_branch
      %347 = sbr.rel (0) target = $region25
    $region24: #{patch_embed_forward.1} parent=1 // pred_region
      %349 = vsyncadd [#allocation3], 0
      %s350 = sshll.u32 [#allocation2], 4
      %s351 = int_to_ptr.vmem [resolvable:$true] %s350
      %s352 = sshll.u32 %s5, 4
      %s353 = int_to_ptr.hbm [resolvable:$true] %s352
      %358 = dma.vmem_to_hbm [thread:$0]  %s351, 512, %s353, [#allocation3], 128, 128, 8
    $region25: #{patch_embed_forward.1} parent=1 // pred_fallthru
      _
    // Predicated region
    $region26: #{patch_embed_forward.1} parent=1 // pred_check
      _
    $region27: #{patch_embed_forward.1} parent=1 // pred_check_branch
      %360 = sbr.rel (0) target = $region29
    $region28: #{patch_embed_forward.1} parent=1 // pred_region
      %362 = dma.done [#allocation3], 512
    $region29: #{patch_embed_forward.1} parent=1 // pred_fallthru
      _
    %363 = vsyncpa [#allocation3], 1

</llo_original>
